<compile_context>
chip_gen: v5e
topology: v5e:2x2
jax: 0.10.0
libtpu: 0.0.40
codegen_flags: <defaults>
</compile_context>

<pallas_src>
import jax
import jax.numpy as jnp
from jax.experimental import pallas as pl
from jax.experimental.pallas import tpu as pltpu

LANE = 128
SUBLANE = 8


def dqn_kernel(x_ref, w1_ref, b1_ref, w2_ref, b2_ref, w3_ref, b3_ref, o_ref):
    # fc1: cast the f32 activation tile to the matmul dtype in-kernel (no
    # wrapper-side HBM pass); MXU matmul with f32 accumulation, bias+ReLU f32.
    x = x_ref[...].astype(w1_ref.dtype)
    h1 = jnp.dot(x, w1_ref[...], preferred_element_type=jnp.float32)
    h1 = jnp.maximum(h1 + b1_ref[...], 0.0)
    # fc2: cast only the dot operand back to the matmul dtype, keep VPU work f32.
    h2 = jnp.dot(h1.astype(w2_ref.dtype), w2_ref[...],
                 preferred_element_type=jnp.float32)
    h2 = jnp.maximum(h2 + b2_ref[...], 0.0)
    # fc3 (no activation). Output columns are lane-padded to 128 -> unmasked stores.
    out = jnp.dot(h2.astype(w3_ref.dtype), w3_ref[...],
                  preferred_element_type=jnp.float32)
    o_ref[...] = (out + b3_ref[...]).astype(o_ref.dtype)


def _round_up(n, m):
    return ((n + m - 1) // m) * m


def prepare_dqn_params(params, *, compute_dtype=jnp.bfloat16):
    """One-time prep: cast weights to the matmul dtype, keep biases f32, and
    zero-pad fc3 to a multiple of 128 output columns (lane-dense stores).
    Do this once (or under jit, where it constant-folds), not per forward."""
    w1, b1, w2, b2, w3, b3 = (params["w1"], params["b1"], params["w2"],
                              params["b2"], params["w3"], params["b3"])
    out_dim = w3.shape[1]
    out_pad = _round_up(out_dim, LANE)
    if out_pad != out_dim:
        w3 = jnp.pad(w3, ((0, 0), (0, out_pad - out_dim)))
        b3 = jnp.pad(b3, ((0, 0), (0, out_pad - out_dim)))
    prepped = {
        "w1": w1.astype(compute_dtype), "b1": b1.astype(jnp.float32),
        "w2": w2.astype(compute_dtype), "b2": b2.astype(jnp.float32),
        "w3": w3.astype(compute_dtype), "b3": b3.astype(jnp.float32),
    }
    return prepped, out_dim


def dqn_forward(x, prepped, out_dim, *, tb=512, out_dtype=jnp.float32):
    """x: (B, input_dim) float32; prepped: output of prepare_dqn_params.

    tb: batch tile (rows per grid step, multiple of 8). Larger tiles amortize
    the ~0.35 us per-step pipeline overhead; capped at 1024 so f32 h1/h2
    intermediates plus double-buffered x/out tiles stay far below v5e's
    16 MiB scoped-VMEM default.  out_dtype=bf16 halves output HBM writeback
    if the consumer tolerates it (accumulation/bias stay f32 regardless).
    """
    w1c, b1f = prepped["w1"], prepped["b1"]
    w2c, b2f = prepped["w2"], prepped["b2"]
    w3c, b3f = prepped["w3"], prepped["b3"]
    B, in_dim = x.shape
    out_pad = w3c.shape[1]

    # Batch tile selection: sublane-aligned, no bigger than needed, capped for
    # v5e VMEM headroom, and split so mid-size batches give >= 2 grid steps
    # (the batch axis is "parallel" -> both v7x TensorCores get work).
    tb = max(SUBLANE, min(_round_up(tb, SUBLANE), 1024))
    tb = min(tb, _round_up(B, SUBLANE))
    if B > SUBLANE:
        tb = min(tb, _round_up(pl.cdiv(B, 2), SUBLANE))
    grid = (pl.cdiv(B, tb),)   # ragged last block handled by Pallas (masked)

    # Weights/biases: full-array blocks with a constant index_map -> fetched
    # once and kept VMEM-resident across all grid steps (~<150 KiB total).
    def resident(a):
        n = a.ndim
        return pl.BlockSpec(a.shape, lambda i: (0,) * n)

    out = pl.pallas_call(
        dqn_kernel,
        # Row count stays B (no batch padding); only columns are lane-padded.
        out_shape=jax.ShapeDtypeStruct((B, out_pad), out_dtype),
        grid_spec=pltpu.PrefetchScalarGridSpec(
            num_scalar_prefetch=0,
            grid=grid,
            in_specs=[
                pl.BlockSpec((tb, in_dim), lambda i: (i, 0)),   # x: tiled over batch
                resident(w1c), resident(b1f),
                resident(w2c), resident(b2f),
                resident(w3c), resident(b3f),
            ],
            out_specs=pl.BlockSpec((tb, out_pad), lambda i: (i, 0)),
        ),
        compiler_params=pltpu.CompilerParams(
            # Batch blocks are independent -> lets v7x shard steps across its
            # 2 TensorCores; no-op on single-TC v5e/v6e.
            dimension_semantics=("parallel",)),
    )(x, w1c, b1f, w2c, b2f, w3c, b3f)

    # Only the lane padding needs slicing off (rows already == B).
    return out[:, :out_dim]


def init_dqn_params(key, input_dim, output_dim):
    """Deterministic synthetic init (PyTorch-Linear-style uniform bounds)."""
    dims = [(input_dim, 256), (256, 128), (128, output_dim)]
    params = {}
    for idx, (fan_in, fan_out) in enumerate(dims, start=1):
        key, kw, kb = jax.random.split(key, 3)
        bound = 1.0 / jnp.sqrt(jnp.float32(fan_in))
        params[f"w{idx}"] = jax.random.uniform(
            kw, (fan_in, fan_out), jnp.float32, -bound, bound)
        params[f"b{idx}"] = jax.random.uniform(
            kb, (1, fan_out), jnp.float32, -bound, bound)
    return params


def dqn_reference(x, p, *, compute_dtype=jnp.bfloat16):
    """Pure-JAX reference with the same cast pattern as the kernel."""
    cd = compute_dtype
    h1 = jnp.maximum(
        jnp.dot(x.astype(cd), p["w1"].astype(cd),
                preferred_element_type=jnp.float32) + p["b1"], 0.0)
    h2 = jnp.maximum(
        jnp.dot(h1.astype(cd), p["w2"].astype(cd),
                preferred_element_type=jnp.float32) + p["b2"], 0.0)
    return jnp.dot(h2.astype(cd), p["w3"].astype(cd),
                   preferred_element_type=jnp.float32) + p["b3"]


if __name__ == "__main__":
    key = jax.random.PRNGKey(0)
    input_dim, output_dim = 8, 4          # e.g. 8-dim state, 4 discrete actions
    kx, kx2, kp = jax.random.split(key, 3)
    params = init_dqn_params(kp, input_dim, output_dim)

    # One-time param prep (bf16 weights, fc3 lane-padded); jit the forward so
    # the prepped constants fold into the executable.
    prepped, out_dim = prepare_dqn_params(params)
    fwd = jax.jit(lambda xs: dqn_forward(xs, prepped, out_dim))

    # Small RL-style batch (single grid step; overhead-bound path).
    x_small = jax.random.normal(kx, (8, input_dim), jnp.float32)
    out_small = jax.block_until_ready(fwd(x_small))
    ref_small = dqn_reference(x_small, params)
    assert out_small.shape == (8, output_dim)
    assert jnp.allclose(out_small, ref_small, atol=5e-3, rtol=5e-3), \
        "small-batch mismatch vs reference"

    # Larger, non-multiple-of-tile batch exercising the tiled/pipelined path
    # with a ragged last block (500 -> two grid steps of 256 rows).
    x_big = jax.random.normal(kx2, (500, input_dim), jnp.float32)
    out_big = jax.block_until_ready(fwd(x_big))
    ref_big = dqn_reference(x_big, params)
    assert out_big.shape == (500, output_dim)
    assert jnp.allclose(out_big, ref_big, atol=5e-3, rtol=5e-3), \
        "big-batch mismatch vs reference"

    print("KERNEL_OK")
</pallas_src>

<mosaic_0001>
module attributes {stable_mosaic.version = 11 : i64} {
  func.func @dqn_kernel(%arg0: i32, %arg1: memref<8x8xf32, #tpu.memory_space<vmem>>, %arg2: memref<8x256xbf16, #tpu.memory_space<vmem>>, %arg3: memref<1x256xf32, #tpu.memory_space<vmem>>, %arg4: memref<256x128xbf16, #tpu.memory_space<vmem>>, %arg5: memref<1x128xf32, #tpu.memory_space<vmem>>, %arg6: memref<128x128xbf16, #tpu.memory_space<vmem>>, %arg7: memref<1x128xf32, #tpu.memory_space<vmem>>, %arg8: memref<8x128xf32, #tpu.memory_space<vmem>>) attributes {dimension_semantics = [#tpu.dimension_semantics<parallel>], iteration_bounds = array<i64: 1>, scalar_prefetch = 0 : i64, scratch_operands = 0 : i64, tpu.core_type = #tpu.core_type<tc>, window_params = [{transform_indices = @transform_0, window_bounds = array<i64: 8, 8>}, {pipeline_mode = #tpu.pipeline_mode<synchronous>, transform_indices = @transform_1, window_bounds = array<i64: 8, 256>}, {pipeline_mode = #tpu.pipeline_mode<synchronous>, transform_indices = @transform_2, window_bounds = array<i64: 1, 256>}, {pipeline_mode = #tpu.pipeline_mode<synchronous>, transform_indices = @transform_3, window_bounds = array<i64: 256, 128>}, {pipeline_mode = #tpu.pipeline_mode<synchronous>, transform_indices = @transform_4, window_bounds = array<i64: 1, 128>}, {pipeline_mode = #tpu.pipeline_mode<synchronous>, transform_indices = @transform_5, window_bounds = array<i64: 128, 128>}, {pipeline_mode = #tpu.pipeline_mode<synchronous>, transform_indices = @transform_6, window_bounds = array<i64: 1, 128>}, {transform_indices = @transform_7, window_bounds = array<i64: 8, 128>}]} {
    %c0 = arith.constant 0 : index
    %c0_0 = arith.constant 0 : index
    %0 = vector.load %arg1[%c0, %c0_0] : memref<8x8xf32, #tpu.memory_space<vmem>>, vector<8x8xf32>
    %1 = arith.truncf %0 : vector<8x8xf32> to vector<8x8xbf16>
    %c0_1 = arith.constant 0 : index
    %c0_2 = arith.constant 0 : index
    %2 = vector.load %arg2[%c0_1, %c0_2] : memref<8x256xbf16, #tpu.memory_space<vmem>>, vector<8x256xbf16>
    %cst = arith.constant dense<0.000000e+00> : vector<8x256xf32>
    %3 = tpu.matmul %1, %2, %cst {dimension_numbers = #tpu.dot_dimension_numbers<[1], [0], [0], [1], [0, 0, 1, 1], [], []>} : vector<8x8xbf16>, vector<8x256xbf16>, vector<8x256xf32> -> vector<8x256xf32>
    %c0_3 = arith.constant 0 : index
    %c0_4 = arith.constant 0 : index
    %4 = vector.load %arg3[%c0_3, %c0_4] : memref<1x256xf32, #tpu.memory_space<vmem>>, vector<1x256xf32>
    %5 = vector.broadcast %4 : vector<1x256xf32> to vector<8x256xf32>
    %6 = arith.addf %3, %5 : vector<8x256xf32>
    %cst_5 = arith.constant 0.000000e+00 : f32
    %7 = vector.broadcast %cst_5 : f32 to vector<8x256xf32>
    %8 = arith.maximumf %6, %7 : vector<8x256xf32>
    %9 = arith.truncf %8 : vector<8x256xf32> to vector<8x256xbf16>
    %c0_6 = arith.constant 0 : index
    %c0_7 = arith.constant 0 : index
    %10 = vector.load %arg4[%c0_6, %c0_7] : memref<256x128xbf16, #tpu.memory_space<vmem>>, vector<256x128xbf16>
    %cst_8 = arith.constant dense<0.000000e+00> : vector<8x128xf32>
    %11 = tpu.matmul %9, %10, %cst_8 {dimension_numbers = #tpu.dot_dimension_numbers<[1], [0], [0], [1], [0, 0, 1, 1], [], []>} : vector<8x256xbf16>, vector<256x128xbf16>, vector<8x128xf32> -> vector<8x128xf32>
    %c0_9 = arith.constant 0 : index
    %c0_10 = arith.constant 0 : index
    %12 = vector.load %arg5[%c0_9, %c0_10] : memref<1x128xf32, #tpu.memory_space<vmem>>, vector<1x128xf32>
    %13 = vector.broadcast %12 : vector<1x128xf32> to vector<8x128xf32>
    %14 = arith.addf %11, %13 : vector<8x128xf32>
    %cst_11 = arith.constant 0.000000e+00 : f32
    %15 = vector.broadcast %cst_11 : f32 to vector<8x128xf32>
    %16 = arith.maximumf %14, %15 : vector<8x128xf32>
    %17 = arith.truncf %16 : vector<8x128xf32> to vector<8x128xbf16>
    %c0_12 = arith.constant 0 : index
    %c0_13 = arith.constant 0 : index
    %18 = vector.load %arg6[%c0_12, %c0_13] : memref<128x128xbf16, #tpu.memory_space<vmem>>, vector<128x128xbf16>
    %cst_14 = arith.constant dense<0.000000e+00> : vector<8x128xf32>
    %19 = tpu.matmul %17, %18, %cst_14 {dimension_numbers = #tpu.dot_dimension_numbers<[1], [0], [0], [1], [0, 0, 1, 1], [], []>} : vector<8x128xbf16>, vector<128x128xbf16>, vector<8x128xf32> -> vector<8x128xf32>
    %c0_15 = arith.constant 0 : index
    %c0_16 = arith.constant 0 : index
    %20 = vector.load %arg7[%c0_15, %c0_16] : memref<1x128xf32, #tpu.memory_space<vmem>>, vector<1x128xf32>
    %21 = vector.broadcast %20 : vector<1x128xf32> to vector<8x128xf32>
    %22 = arith.addf %19, %21 : vector<8x128xf32>
    %c0_17 = arith.constant 0 : index
    %c0_18 = arith.constant 0 : index
    %23 = vector.load %arg8[%c0_17, %c0_18] : memref<8x128xf32, #tpu.memory_space<vmem>>, vector<8x128xf32>
    tpu.vector_store %arg8[%c0_17, %c0_18], %22 {strides = array<i32>} : memref<8x128xf32, #tpu.memory_space<vmem>>, vector<8x128xf32>,
    return
  }
  func.func @transform_0(%arg0: i32) -> (i32, i32) {
    %c0_i32 = arith.constant 0 : i32
    %c0_i32_0 = arith.constant 0 : i32
    return %arg0, %c0_i32 : i32, i32
  }
  func.func @transform_1(%arg0: i32) -> (i32, i32) {
    %c0_i32 = arith.constant 0 : i32
    %c0_i32_0 = arith.constant 0 : i32
    %c0_i32_1 = arith.constant 0 : i32
    return %c0_i32, %c0_i32_0 : i32, i32
  }
  func.func @transform_2(%arg0: i32) -> (i32, i32) {
    %c0_i32 = arith.constant 0 : i32
    %c0_i32_0 = arith.constant 0 : i32
    %c0_i32_1 = arith.constant 0 : i32
    return %c0_i32, %c0_i32_0 : i32, i32
  }
  func.func @transform_3(%arg0: i32) -> (i32, i32) {
    %c0_i32 = arith.constant 0 : i32
    %c0_i32_0 = arith.constant 0 : i32
    %c0_i32_1 = arith.constant 0 : i32
    return %c0_i32, %c0_i32_0 : i32, i32
  }
  func.func @transform_4(%arg0: i32) -> (i32, i32) {
    %c0_i32 = arith.constant 0 : i32
    %c0_i32_0 = arith.constant 0 : i32
    %c0_i32_1 = arith.constant 0 : i32
    return %c0_i32, %c0_i32_0 : i32, i32
  }
  func.func @transform_5(%arg0: i32) -> (i32, i32) {
    %c0_i32 = arith.constant 0 : i32
    %c0_i32_0 = arith.constant 0 : i32
    %c0_i32_1 = arith.constant 0 : i32
    return %c0_i32, %c0_i32_0 : i32, i32
  }
  func.func @transform_6(%arg0: i32) -> (i32, i32) {
    %c0_i32 = arith.constant 0 : i32
    %c0_i32_0 = arith.constant 0 : i32
    %c0_i32_1 = arith.constant 0 : i32
    return %c0_i32, %c0_i32_0 : i32, i32
  }
  func.func @transform_7(%arg0: i32) -> (i32, i32) {
    %c0_i32 = arith.constant 0 : i32
    %c0_i32_0 = arith.constant 0 : i32
    return %arg0, %c0_i32 : i32, i32
  }
}

</mosaic_0001>

<llo_original>
// kernel: _lambda_.1
$region0: #{_lambda_.1}
  #allocation0 [shape = 'u32[]', space=smem, size = 0x4, offset = 0x4, fixed_abs, tag = 'smem constant byte address 0x4 - core index']
  #allocation1 [shape = 'u32[72,128]{1,0:T(1,128)}', space=vmem, size = 0x9000, scoped, tag = 'internal scratch']
  %s0 = inlined_call_operand.hbm [shape: f32[8,8], index: 0, kind: input, shape index: {}]
  %s1 = inlined_call_operand.hbm [shape: bf16[8,256], index: 1, kind: input, shape index: {}]
  %s2 = inlined_call_operand.hbm [shape: f32[1,256], index: 2, kind: input, shape index: {}]
  %s3 = inlined_call_operand.hbm [shape: bf16[256,128], index: 3, kind: input, shape index: {}]
  %s4 = inlined_call_operand.vmem [shape: f32[1,128], index: 4, kind: input, shape index: {}]
  %s5 = inlined_call_operand.hbm [shape: bf16[128,128], index: 5, kind: input, shape index: {}]
  %s6 = inlined_call_operand.vmem [shape: f32[1,128], index: 6, kind: input, shape index: {}]
  %s7 = inlined_call_operand.vmem [shape: f32[8,128], index: 7, kind: output, shape index: {}]
  %s8 = sld [smem:[#allocation0]]
  $region58: #{_lambda_.1} parent=0
    _
  %s10 = ssub.s32 1, %s8
  %s11 = scalar_select 0, %s10, %s8
  $region1: #{_lambda_.1} parent=0
    #allocation2 [shape = 'u8[4096]{0}', space=vmem, size = 0x1000, scoped, tag = 'input window, operand 0, single buffered']
    #allocation3 [shape = 's32[1]{0}', space=sflag, size = 0x4, scoped, tag = 'scoped memory for _lambda_.1']
    #allocation4 [shape = 'u8[4096]{0}', space=vmem, size = 0x1000, scoped, tag = 'input window, operand 1, single buffered']
    #allocation5 [shape = 's32[1]{0}', space=sflag, size = 0x4, scoped, tag = 'scoped memory for _lambda_.1']
    #allocation6 [shape = 'u8[1024]{0}', space=vmem, size = 0x400, scoped, tag = 'input window, operand 2, single buffered']
    #allocation7 [shape = 'u8[65536]{0}', space=vmem, size = 0x10000, scoped, tag = 'input window, operand 3, single buffered']
    #allocation8 [shape = 's32[1]{0}', space=sflag, size = 0x4, scoped, tag = 'scoped memory for _lambda_.1']
    #allocation9 [shape = 'u8[32768]{0}', space=vmem, size = 0x8000, scoped, tag = 'input window, operand 5, single buffered']
    %12 = vsyncpa [#allocation3], 0
    %13 = vsyncpa [#allocation5], 0
    %14 = vsyncpa [#allocation8], 0
    // Predicated region
    $region2: #{_lambda_.1} parent=1 // pred_check
      _
    $region3: #{_lambda_.1} parent=1 // pred_check_branch
      %16 = sbr.rel (0) target = $region5
    $region4: #{_lambda_.1} parent=1 // pred_region
      %18 = vsyncadd [#allocation3], 0
      %s20 = sshll.u32 %s0, 4
      %s21 = int_to_ptr.hbm [resolvable:$true] %s20
      %s22 = sshll.u32 [#allocation2], 4
      %s23 = int_to_ptr.vmem [resolvable:$true] %s22
      %25 = dma.hbm_to_vmem [thread:$0]  %s21, 128, %s23, [#allocation3]
    $region5: #{_lambda_.1} parent=1 // pred_fallthru
      _
    // Predicated region
    $region6: #{_lambda_.1} parent=1 // pred_check
      _
    $region7: #{_lambda_.1} parent=1 // pred_check_branch
      %27 = sbr.rel (0) target = $region9
    $region8: #{_lambda_.1} parent=1 // pred_region
      %29 = vsyncadd [#allocation5], 0
      %s31 = sshll.u32 %s1, 4
      %s32 = int_to_ptr.hbm [resolvable:$true] %s31
      %s33 = sshll.u32 [#allocation4], 4
      %s34 = int_to_ptr.vmem [resolvable:$true] %s33
      %36 = dma.hbm_to_vmem [thread:$0]  %s32, 128, %s34, [#allocation5]
    $region9: #{_lambda_.1} parent=1 // pred_fallthru
      _
    // Predicated region
    $region10: #{_lambda_.1} parent=1 // pred_check
      _
    $region11: #{_lambda_.1} parent=1 // pred_check_branch
      %38 = sbr.rel (0) target = $region13
    $region12: #{_lambda_.1} parent=1 // pred_region
      %40 = vsyncadd [#allocation5], 0
      %s42 = sshll.u32 %s2, 4
      %s43 = int_to_ptr.hbm [resolvable:$true] %s42
      %s44 = sshll.u32 [#allocation6], 4
      %s45 = int_to_ptr.vmem [resolvable:$true] %s44
      %47 = dma.hbm_to_vmem [thread:$0]  %s43, 32, %s45, [#allocation5]
    $region13: #{_lambda_.1} parent=1 // pred_fallthru
      _
    // Predicated region
    $region14: #{_lambda_.1} parent=1 // pred_check
      _
    $region15: #{_lambda_.1} parent=1 // pred_check_branch
      %49 = sbr.rel (0) target = $region17
    $region16: #{_lambda_.1} parent=1 // pred_region
      %51 = vsyncadd [#allocation8], 0
      %s52 = sshll.u32 %s3, 4
      %s53 = int_to_ptr.hbm [resolvable:$true] %s52
      %s54 = sshll.u32 [#allocation7], 4
      %s55 = int_to_ptr.vmem [resolvable:$true] %s54
      %60 = dma.hbm_to_vmem [thread:$0]  %s53, 2048, %s55, [#allocation8], 64, 64, 4
    $region17: #{_lambda_.1} parent=1 // pred_fallthru
      _
    // Predicated region
    $region18: #{_lambda_.1} parent=1 // pred_check
      _
    $region19: #{_lambda_.1} parent=1 // pred_check_branch
      %62 = sbr.rel (0) target = $region21
    $region20: #{_lambda_.1} parent=1 // pred_region
      _
    $region21: #{_lambda_.1} parent=1 // pred_fallthru
      _
    // Predicated region
    $region22: #{_lambda_.1} parent=1 // pred_check
      _
    $region23: #{_lambda_.1} parent=1 // pred_check_branch
      %64 = sbr.rel (0) target = $region25
    $region24: #{_lambda_.1} parent=1 // pred_region
      %66 = vsyncadd [#allocation8], 0
      %s67 = sshll.u32 %s5, 4
      %s68 = int_to_ptr.hbm [resolvable:$true] %s67
      %s69 = sshll.u32 [#allocation9], 4
      %s70 = int_to_ptr.vmem [resolvable:$true] %s69
      %75 = dma.hbm_to_vmem [thread:$0]  %s68, 1024, %s70, [#allocation8], 64, 64, 4
    $region25: #{_lambda_.1} parent=1 // pred_fallthru
      _
    // Predicated region
    $region26: #{_lambda_.1} parent=1 // pred_check
      _
    $region27: #{_lambda_.1} parent=1 // pred_check_branch
      %77 = sbr.rel (0) target = $region29
    $region28: #{_lambda_.1} parent=1 // pred_region
      _
    $region29: #{_lambda_.1} parent=1 // pred_fallthru
      _
    // Predicated region
    $region30: #{_lambda_.1} parent=1 // pred_check
      _
    $region31: #{_lambda_.1} parent=1 // pred_check_branch
      %79 = sbr.rel (0) target = $region33
    $region32: #{_lambda_.1} parent=1 // pred_region
      %81 = dma.done [#allocation3], 128
    $region33: #{_lambda_.1} parent=1 // pred_fallthru
      _
    // Predicated region
    $region34: #{_lambda_.1} parent=1 // pred_check
      _
    $region35: #{_lambda_.1} parent=1 // pred_check_branch
      %83 = sbr.rel (0) target = $region37
    $region36: #{_lambda_.1} parent=1 // pred_region
      %85 = dma.done [#allocation5], 128
    $region37: #{_lambda_.1} parent=1 // pred_fallthru
      _
    // Predicated region
    $region38: #{_lambda_.1} parent=1 // pred_check
      _
    $region39: #{_lambda_.1} parent=1 // pred_check_branch
      %87 = sbr.rel (0) target = $region41
    $region40: #{_lambda_.1} parent=1 // pred_region
      %89 = dma.done [#allocation5], 32
    $region41: #{_lambda_.1} parent=1 // pred_fallthru
      _
    // Predicated region
    $region42: #{_lambda_.1} parent=1 // pred_check
      _
    $region43: #{_lambda_.1} parent=1 // pred_check_branch
      %91 = sbr.rel (0) target = $region45
    $region44: #{_lambda_.1} parent=1 // pred_region
      %93 = dma.done [#allocation8], 2048
    $region45: #{_lambda_.1} parent=1 // pred_fallthru
      _
    // Predicated region
    $region46: #{_lambda_.1} parent=1 // pred_check
      _
    $region47: #{_lambda_.1} parent=1 // pred_check_branch
      %95 = sbr.rel (0) target = $region49
    $region48: #{_lambda_.1} parent=1 // pred_region
      %97 = dma.done [#allocation8], 1024
    $region49: #{_lambda_.1} parent=1 // pred_fallthru
      _
    %v99 = vld [vmem:[#allocation2] sm:$0xff]
    %v100 = vpack.c.bf16 %v99, %v99
    %v101 = vld [vmem:[#allocation4] sm:$0xff]
    %v102 = vld [vmem:[#allocation6] sm:$0x3]
    %v104 = vperm.slane %v102, 0
    %v105 = vperm.slane %v102, 1
    %v109 = vunpack.c.l.b16 %v101
    %v110 = vunpack.c.h.b16 %v101
    %v111 = vpack.c.b16 %v109, %v109
    %v112 = vpack.c.b16 %v110, %v110
    %vm113 = vcmask 64512
    %v115 = vsel %vm113, %v100, 0
    %vm117 = vcmask 1043456
    %v119 = vsel %vm117, %v111, 0
    %v122 = vsel %vm117, %v112, 0
    %124 = vmatpush.bf16.msra.mxu0 0
    %125 = vmatpush.bf16.msra.mxu0 0
    %126 = vmatpush.bf16.msra.mxu0 0
    %127 = vmatpush.bf16.msra.mxu0 0
    %128 = vmatpush.bf16.msra.mxu0 0
    %129 = vmatpush.bf16.msra.mxu0 0
    %130 = vmatpush.bf16.msra.mxu0 0
    %131 = vmatpush.bf16.msra.mxu0 %v119
    %132 = vmatmul.bf16.gmra.mxu0 %v115
    %v133 = vpop.f32.mrf.mxu0
    %v134 = vadd.f32 %v104, %v133
    %v135 = vpop.f32.mrf.mxu0
    %136 = vdwg.mxu0
    %137 = vmatpush.bf16.msra.mxu0 0
    %138 = vmatpush.bf16.msra.mxu0 0
    %139 = vmatpush.bf16.msra.mxu0 0
    %140 = vmatpush.bf16.msra.mxu0 0
    %141 = vmatpush.bf16.msra.mxu0 0
    %142 = vmatpush.bf16.msra.mxu0 0
    %143 = vmatpush.bf16.msra.mxu0 0
    %144 = vmatpush.bf16.msra.mxu0 %v122
    %145 = vmatmul.bf16.gmra.mxu0 %v115
    %v146 = vpop.f32.mrf.mxu0
    %v147 = vadd.f32 %v105, %v146
    %v148 = vpop.f32.mrf.mxu0
    %149 = vdwg.mxu0
    %v150 = vmax.f32 %v134, 0.0
    %v151 = vmax.f32 %v147, 0.0
    %v152 = vpack.c.bf16 %v150, %v150
    %v153 = vpack.c.bf16 %v151, %v151
    %v154 = vld [vmem:[#allocation7] sm:$0xf]
    %v155 = vld [vmem:[#allocation7 + $0x4] sm:$0xf]
    %v156 = vld [vmem:[#allocation7 + $0x8] sm:$0xf]
    %v157 = vld [vmem:[#allocation7 + $0xc] sm:$0xf]
    %v158 = vld [vmem:[#allocation7 + $0x10] sm:$0xf]
    %v159 = vld [vmem:[#allocation7 + $0x14] sm:$0xf]
    %v160 = vld [vmem:[#allocation7 + $0x18] sm:$0xf]
    %v161 = vld [vmem:[#allocation7 + $0x1c] sm:$0xf]
    %v162 = vld [vmem:[#allocation7 + $0x20] sm:$0xf]
    %v163 = vld [vmem:[#allocation7 + $0x24] sm:$0xf]
    %v164 = vld [vmem:[#allocation7 + $0x28] sm:$0xf]
    %v165 = vld [vmem:[#allocation7 + $0x2c] sm:$0xf]
    %v166 = vld [vmem:[#allocation7 + $0x30] sm:$0xf]
    %v167 = vld [vmem:[#allocation7 + $0x34] sm:$0xf]
    %v168 = vld [vmem:[#allocation7 + $0x38] sm:$0xf]
    %v169 = vld [vmem:[#allocation7 + $0x3c] sm:$0xf]
    %v170 = vld [vmem:[#allocation7 + $0x40] sm:$0xf]
    %v171 = vld [vmem:[#allocation7 + $0x44] sm:$0xf]
    %v172 = vld [vmem:[#allocation7 + $0x48] sm:$0xf]
    %v173 = vld [vmem:[#allocation7 + $0x4c] sm:$0xf]
    %v174 = vld [vmem:[#allocation7 + $0x50] sm:$0xf]
    %v175 = vld [vmem:[#allocation7 + $0x54] sm:$0xf]
    %v176 = vld [vmem:[#allocation7 + $0x58] sm:$0xf]
    %v177 = vld [vmem:[#allocation7 + $0x5c] sm:$0xf]
    %v178 = vld [vmem:[#allocation7 + $0x60] sm:$0xf]
    %v179 = vld [vmem:[#allocation7 + $0x64] sm:$0xf]
    %v180 = vld [vmem:[#allocation7 + $0x68] sm:$0xf]
    %v181 = vld [vmem:[#allocation7 + $0x6c] sm:$0xf]
    %v182 = vld [vmem:[#allocation7 + $0x70] sm:$0xf]
    %v183 = vld [vmem:[#allocation7 + $0x74] sm:$0xf]
    %v184 = vld [vmem:[#allocation7 + $0x78] sm:$0xf]
    %v185 = vld [vmem:[#allocation7 + $0x7c] sm:$0xf]
    %v186 = vld [vmem:[%s4] sm:$0x1]
    %v188 = vperm.slane %v186, 0
    %v222 = vunpack.c.l.b16 %v154
    %v223 = vunpack.c.l.b16 %v155
    %v224 = vunpack.c.l.b16 %v156
    %v225 = vunpack.c.l.b16 %v157
    %v226 = vunpack.c.l.b16 %v158
    %v227 = vunpack.c.l.b16 %v159
    %v228 = vunpack.c.l.b16 %v160
    %v229 = vunpack.c.l.b16 %v161
    %v230 = vunpack.c.l.b16 %v162
    %v231 = vunpack.c.l.b16 %v163
    %v232 = vunpack.c.l.b16 %v164
    %v233 = vunpack.c.l.b16 %v165
    %v234 = vunpack.c.l.b16 %v166
    %v235 = vunpack.c.l.b16 %v167
    %v236 = vunpack.c.l.b16 %v168
    %v237 = vunpack.c.l.b16 %v169
    %v238 = vunpack.c.l.b16 %v170
    %v239 = vunpack.c.l.b16 %v171
    %v240 = vunpack.c.l.b16 %v172
    %v241 = vunpack.c.l.b16 %v173
    %v242 = vunpack.c.l.b16 %v174
    %v243 = vunpack.c.l.b16 %v175
    %v244 = vunpack.c.l.b16 %v176
    %v245 = vunpack.c.l.b16 %v177
    %v246 = vunpack.c.l.b16 %v178
    %v247 = vunpack.c.l.b16 %v179
    %v248 = vunpack.c.l.b16 %v180
    %v249 = vunpack.c.l.b16 %v181
    %v250 = vunpack.c.l.b16 %v182
    %v251 = vunpack.c.l.b16 %v183
    %v252 = vunpack.c.l.b16 %v184
    %v253 = vunpack.c.l.b16 %v185
    %v254 = vpack.c.b16 %v223, %v222
    %v255 = vpack.c.b16 %v225, %v224
    %v256 = vpack.c.b16 %v227, %v226
    %v257 = vpack.c.b16 %v229, %v228
    %v258 = vpack.c.b16 %v231, %v230
    %v259 = vpack.c.b16 %v233, %v232
    %v260 = vpack.c.b16 %v235, %v234
    %v261 = vpack.c.b16 %v237, %v236
    %v262 = vpack.c.b16 %v239, %v238
    %v263 = vpack.c.b16 %v241, %v240
    %v264 = vpack.c.b16 %v243, %v242
    %v265 = vpack.c.b16 %v245, %v244
    %v266 = vpack.c.b16 %v247, %v246
    %v267 = vpack.c.b16 %v249, %v248
    %v268 = vpack.c.b16 %v251, %v250
    %v269 = vpack.c.b16 %v253, %v252
    %286 = vmatpush.bf16.msra.mxu0 %v261
    %287 = vmatpush.bf16.msra.mxu0 %v260
    %288 = vmatpush.bf16.msra.mxu0 %v259
    %289 = vmatpush.bf16.msra.mxu0 %v258
    %290 = vmatpush.bf16.msra.mxu0 %v257
    %291 = vmatpush.bf16.msra.mxu0 %v256
    %292 = vmatpush.bf16.msra.mxu0 %v255
    %293 = vmatpush.bf16.msra.mxu0 %v254
    %294 = vmatmul.bf16.gmra.mxu0 %v152
    %v295 = vpop.f32.mrf.mxu0
    %v296 = vadd.f32 %v188, %v295
    %v297 = vpop.f32.mrf.mxu0
    %298 = vdwg.mxu0
    %299 = vmatpush.bf16.msra.mxu0 %v269
    %300 = vmatpush.bf16.msra.mxu0 %v268
    %301 = vmatpush.bf16.msra.mxu0 %v267
    %302 = vmatpush.bf16.msra.mxu0 %v266
    %303 = vmatpush.bf16.msra.mxu0 %v265
    %304 = vmatpush.bf16.msra.mxu0 %v264
    %305 = vmatpush.bf16.msra.mxu0 %v263
    %306 = vmatpush.bf16.msra.mxu0 %v262
    %307 = vmatmul.bf16.gmra.mxu0 %v153
    %v308 = vpop.f32.mrf.mxu0
    %v309 = vadd.f32 %v296, %v308
    %v310 = vpop.f32.mrf.mxu0
    %311 = vdwg.mxu0
    %v312 = vmax.f32 %v309, 0.0
    %v313 = vpack.c.bf16 %v312, %v312
    %v314 = vld [vmem:[#allocation9] sm:$0xf]
    %v315 = vld [vmem:[#allocation9 + $0x4] sm:$0xf]
    %v316 = vld [vmem:[#allocation9 + $0x8] sm:$0xf]
    %v317 = vld [vmem:[#allocation9 + $0xc] sm:$0xf]
    %v318 = vld [vmem:[#allocation9 + $0x10] sm:$0xf]
    %v319 = vld [vmem:[#allocation9 + $0x14] sm:$0xf]
    %v320 = vld [vmem:[#allocation9 + $0x18] sm:$0xf]
    %v321 = vld [vmem:[#allocation9 + $0x1c] sm:$0xf]
    %v322 = vld [vmem:[#allocation9 + $0x20] sm:$0xf]
    %v323 = vld [vmem:[#allocation9 + $0x24] sm:$0xf]
    %v324 = vld [vmem:[#allocation9 + $0x28] sm:$0xf]
    %v325 = vld [vmem:[#allocation9 + $0x2c] sm:$0xf]
    %v326 = vld [vmem:[#allocation9 + $0x30] sm:$0xf]
    %v327 = vld [vmem:[#allocation9 + $0x34] sm:$0xf]
    %v328 = vld [vmem:[#allocation9 + $0x38] sm:$0xf]
    %v329 = vld [vmem:[#allocation9 + $0x3c] sm:$0xf]
    %v330 = vld [vmem:[%s6] sm:$0x1]
    %v332 = vperm.slane %v330, 0
    %v350 = vunpack.c.l.b16 %v314
    %v351 = vunpack.c.l.b16 %v315
    %v352 = vunpack.c.l.b16 %v316
    %v353 = vunpack.c.l.b16 %v317
    %v354 = vunpack.c.l.b16 %v318
    %v355 = vunpack.c.l.b16 %v319
    %v356 = vunpack.c.l.b16 %v320
    %v357 = vunpack.c.l.b16 %v321
    %v358 = vunpack.c.l.b16 %v322
    %v359 = vunpack.c.l.b16 %v323
    %v360 = vunpack.c.l.b16 %v324
    %v361 = vunpack.c.l.b16 %v325
    %v362 = vunpack.c.l.b16 %v326
    %v363 = vunpack.c.l.b16 %v327
    %v364 = vunpack.c.l.b16 %v328
    %v365 = vunpack.c.l.b16 %v329
    %v366 = vpack.c.b16 %v351, %v350
    %v367 = vpack.c.b16 %v353, %v352
    %v368 = vpack.c.b16 %v355, %v354
    %v369 = vpack.c.b16 %v357, %v356
    %v370 = vpack.c.b16 %v359, %v358
    %v371 = vpack.c.b16 %v361, %v360
    %v372 = vpack.c.b16 %v363, %v362
    %v373 = vpack.c.b16 %v365, %v364
    %382 = vmatpush.bf16.msra.mxu0 %v373
    %383 = vmatpush.bf16.msra.mxu0 %v372
    %384 = vmatpush.bf16.msra.mxu0 %v371
    %385 = vmatpush.bf16.msra.mxu0 %v370
    %386 = vmatpush.bf16.msra.mxu0 %v369
    %387 = vmatpush.bf16.msra.mxu0 %v368
    %388 = vmatpush.bf16.msra.mxu0 %v367
    %389 = vmatpush.bf16.msra.mxu0 %v366
    %390 = vmatmul.bf16.gmra.mxu0 %v313
    %v391 = vpop.f32.mrf.mxu0
    %v392 = vadd.f32 %v332, %v391
    %v393 = vpop.f32.mrf.mxu0
    %394 = vdwg.mxu0
    %395 = vst [vmem:[%s7] sm:$0xff] %v392
    // Predicated region
    $region50: #{_lambda_.1} parent=1 // pred_check
      _
    $region51: #{_lambda_.1} parent=1 // pred_check_branch
      %397 = sbr.rel (0) target = $region53
    $region52: #{_lambda_.1} parent=1 // pred_region
      _
    $region53: #{_lambda_.1} parent=1 // pred_fallthru
      _
    // Predicated region
    $region54: #{_lambda_.1} parent=1 // pred_check
      _
    $region55: #{_lambda_.1} parent=1 // pred_check_branch
      %399 = sbr.rel (0) target = $region57
    $region56: #{_lambda_.1} parent=1 // pred_region
      _
    $region57: #{_lambda_.1} parent=1 // pred_fallthru
      _
    %400 = vsyncpa [#allocation3], 1
    %401 = vsyncpa [#allocation5], 1
    %402 = vsyncpa [#allocation8], 1

</llo_original>
